<compile_context>
chip_gen: v5e
topology: v5e:2x2
jax: 0.10.0
libtpu: 0.0.40
codegen_flags: <defaults>
</compile_context>

<pallas_src>
import functools
import math

import jax
import jax.numpy as jnp
from jax.experimental import pallas as pl
from jax.experimental.pallas import tpu as pltpu


def _cdiv(a, b):
    return -(-a // b)


def _round_up(a, b):
    return _cdiv(a, b) * b


def _target_lane_width():
    """256 lanes on 256-wide-MXU chips (v6e/v7x), 128 otherwise/unknown."""
    try:
        kind = jax.devices()[0].device_kind.lower()
    except Exception:
        return 128
    for tag in ("v6", "v7", "trillium"):
        if tag in kind:
            return 256
    return 128


def _choose_fold(d, target_l):
    """Return g such that L = g * d is a multiple of 128 lanes (or g = 1)."""
    if d % 128 == 0:
        return 1                       # already lane-dense; plain XLU reduce
    base_l = math.lcm(d, 128)
    if base_l > 512:
        return 1                       # fold too wide; masked fallback
    if d < target_l and target_l % base_l == 0:
        return target_l // d           # fill the wide MXU tile (v6e/v7x)
    return base_l // d


def _segment_sums(v_f32, proj_bf16, n_terms):
    """Per-segment sums (broadcast back to lanes) via a 0/1 block-diagonal
    indicator on the MXU.  f32 values are split into n_terms bf16 terms so the
    matmuls run at single-pass DEFAULT precision while keeping ~f32 accuracy
    (the 0/1 indicator is exact in bf16; accumulation is f32 in the MXU)."""
    acc = None
    resid = v_f32
    for t in range(n_terms):
        term = resid.astype(jnp.bfloat16)
        part = jnp.dot(term, proj_bf16, preferred_element_type=jnp.float32)
        acc = part if acc is None else acc + part
        if t + 1 < n_terms:
            resid = resid - term.astype(jnp.float32)
    return acc


def layernorm_fold_kernel(x_ref, proj_ref, scale_ref, shift_ref, o_ref, *,
                          eps, d, n_terms):
    """Block (row_tile, L) where each block row holds g = L//d folded rows."""
    x = x_ref[...].astype(jnp.float32)
    proj = proj_ref[...]
    inv_d = jnp.float32(1.0 / d)

    mean = _segment_sums(x, proj, n_terms) * inv_d
    xc = x - mean
    var = _segment_sums(xc * xc, proj, n_terms) * inv_d

    inv_std = jax.lax.rsqrt(var + jnp.float32(eps))
    out = xc * inv_std
    out = scale_ref[...].astype(jnp.float32) * out + shift_ref[...].astype(jnp.float32)
    o_ref[...] = out.astype(o_ref.dtype)


def layernorm_rowreduce_kernel(x_ref, scale_ref, shift_ref, o_ref, *, eps, d):
    """g == 1 path: d spans whole lane axis; plain XLU row reduction."""
    x = x_ref[...].astype(jnp.float32)
    inv_d = jnp.float32(1.0 / d)

    mean = jnp.sum(x, axis=-1, keepdims=True) * inv_d
    xc = x - mean
    var = jnp.sum(xc * xc, axis=-1, keepdims=True) * inv_d

    inv_std = jax.lax.rsqrt(var + jnp.float32(eps))
    out = xc * inv_std
    out = scale_ref[...].astype(jnp.float32) * out + shift_ref[...].astype(jnp.float32)
    o_ref[...] = out.astype(o_ref.dtype)


def layer_norm(x, scale, shift, *, eps=1e-5):
    """LayerNorm over the last dim. x: (..., emb_dim); scale/shift: (emb_dim,)."""
    orig_shape = x.shape
    d = int(orig_shape[-1])
    rows = int(math.prod(orig_shape[:-1])) if len(orig_shape) > 1 else 1
    dtype = x.dtype
    itemsize = jnp.dtype(dtype).itemsize

    # Sublane packing: 8 rows for 4-byte dtypes, 16 for 2-byte, 32 for 1-byte.
    sublane_mult = max(8, 8 * (4 // itemsize))

    # Lane-dense fold (generalized to non-divisors of 128 via lcm; widened to
    # 256 lanes on 256-wide-MXU chips).
    g = _choose_fold(d, _target_lane_width())
    L = g * d

    x2 = x.reshape(rows, d)
    pad_rows = (-rows) % g
    if pad_rows:
        # Only <= g-1 rows of padding so the fold reshape is legal; the bulk
        # ragged tail is handled by partial boundary blocks, not a full pad.
        x2 = jnp.pad(x2, ((0, pad_rows), (0, 0)))
    total_rows = rows + pad_rows
    folded_rows = total_rows // g
    xf = x2.reshape(folded_rows, L)                  # free row-major reshape

    # Row tile from a conservative VMEM budget (double-buffered in + out).
    vmem_tile_budget = 12 * 1024 * 1024
    max_tile_rows = max(sublane_mult, vmem_tile_budget // (4 * L * itemsize))
    row_tile = (min(4096, max_tile_rows) // sublane_mult) * sublane_mult
    row_tile = max(row_tile, sublane_mult)
    row_tile = min(row_tile, _round_up(folded_rows, sublane_mult))
    # Keep >= 4 grid steps (>= 2 per TensorCore on v7x) when there is data for it.
    min_steps = 4
    if folded_rows >= min_steps * sublane_mult:
        row_tile = min(row_tile, _round_up(_cdiv(folded_rows, min_steps), sublane_mult))

    grid = (_cdiv(folded_rows, row_tile),)           # partial last block OK

    # Per-row affine params, tiled across folded segments: lane k -> param[k % d].
    if g > 1:
        scale_f = jnp.tile(scale.reshape(1, d), (1, g))
        shift_f = jnp.tile(shift.reshape(1, d), (1, g))
        seg = jnp.arange(L, dtype=jnp.int32) // d
        proj = (seg[:, None] == seg[None, :]).astype(jnp.bfloat16)  # exact 0/1
    else:
        scale_f = scale.reshape(1, d)
        shift_f = shift.reshape(1, d)
        proj = None

    n_terms = 2 if itemsize >= 4 else 1              # f32 -> hi+residual split

    elems = folded_rows * L
    flops = 8 * elems
    if g > 1:
        flops += 4 * n_terms * elems * L             # 2 reductions x n_terms matmuls
    cost = pl.CostEstimate(
        flops=int(flops),
        transcendentals=int(elems),                  # rsqrt over the full tile
        bytes_accessed=int(2 * elems * itemsize
                           + (L * L * 2 if g > 1 else 0)
                           + 2 * L * jnp.dtype(scale.dtype).itemsize),
    )

    if g > 1:
        kernel = functools.partial(layernorm_fold_kernel, eps=float(eps), d=d,
                                   n_terms=n_terms)
        in_specs = [
            pl.BlockSpec((row_tile, L), lambda i: (i, 0)),
            pl.BlockSpec((L, L), lambda i: (0, 0)),   # resident; DMA'd once
            pl.BlockSpec((1, L), lambda i: (0, 0)),
            pl.BlockSpec((1, L), lambda i: (0, 0)),
        ]
        operands = (xf, proj, scale_f, shift_f)
    else:
        kernel = functools.partial(layernorm_rowreduce_kernel, eps=float(eps), d=d)
        in_specs = [
            pl.BlockSpec((row_tile, L), lambda i: (i, 0)),
            pl.BlockSpec((1, L), lambda i: (0, 0)),
            pl.BlockSpec((1, L), lambda i: (0, 0)),
        ]
        operands = (xf, scale_f, shift_f)

    out = pl.pallas_call(
        kernel,
        out_shape=jax.ShapeDtypeStruct((folded_rows, L), dtype),
        grid_spec=pltpu.PrefetchScalarGridSpec(
            num_scalar_prefetch=0,
            grid=grid,
            in_specs=in_specs,
            out_specs=pl.BlockSpec((row_tile, L), lambda i: (i, 0)),
        ),
        compiler_params=pltpu.CompilerParams(
            dimension_semantics=("parallel",),
            vmem_limit_bytes=32 * 1024 * 1024,
        ),
        cost_estimate=cost,
    )(*operands)

    out = out.reshape(total_rows, d)
    if pad_rows:
        out = out[:rows]
    return out.reshape(orig_shape)


if __name__ == "__main__":
    # cfg = {'emb_dim': 32}; deterministic params: scale = ones, shift = zeros
    emb_dim = 32
    batch, seq = 2, 8

    key = jax.random.PRNGKey(0)
    x = jax.random.normal(key, (batch, seq, emb_dim), dtype=jnp.float32)
    scale = jnp.ones((emb_dim,), dtype=jnp.float32)
    shift = jnp.zeros((emb_dim,), dtype=jnp.float32)

    out = layer_norm(x, scale, shift, eps=1e-5)
    out = jax.block_until_ready(out)

    # Pure-JAX reference (matches torch LayerNorm / var(unbiased=False)).
    mean = x.mean(axis=-1, keepdims=True)
    var = ((x - mean) ** 2).mean(axis=-1, keepdims=True)
    ref = scale * ((x - mean) / jnp.sqrt(var + 1e-5)) + shift

    assert out.shape == x.shape
    assert jnp.allclose(out, ref, atol=1e-4, rtol=1e-4), "mismatch vs reference"

    print("KERNEL_OK")
</pallas_src>

<mosaic_0001>
module attributes {stable_mosaic.version = 11 : i64} {
  func.func @layernorm_fold_kernel(%arg0: i32, %arg1: memref<8x128xf32, #tpu.memory_space<vmem>>, %arg2: memref<128x128xbf16, #tpu.memory_space<vmem>>, %arg3: memref<1x128xf32, #tpu.memory_space<vmem>>, %arg4: memref<1x128xf32, #tpu.memory_space<vmem>>, %arg5: memref<8x128xf32, #tpu.memory_space<vmem>>) attributes {dimension_semantics = [#tpu.dimension_semantics<parallel>], iteration_bounds = array<i64: 1>, scalar_prefetch = 0 : i64, scratch_operands = 0 : i64, tpu.core_type = #tpu.core_type<tc>, window_params = [{transform_indices = @transform_0, window_bounds = array<i64: 8, 128>}, {pipeline_mode = #tpu.pipeline_mode<synchronous>, transform_indices = @transform_1, window_bounds = array<i64: 128, 128>}, {pipeline_mode = #tpu.pipeline_mode<synchronous>, transform_indices = @transform_2, window_bounds = array<i64: 1, 128>}, {pipeline_mode = #tpu.pipeline_mode<synchronous>, transform_indices = @transform_3, window_bounds = array<i64: 1, 128>}, {transform_indices = @transform_4, window_bounds = array<i64: 8, 128>}]} {
    %c0 = arith.constant 0 : index
    %c0_0 = arith.constant 0 : index
    %0 = vector.load %arg1[%c0, %c0_0] : memref<8x128xf32, #tpu.memory_space<vmem>>, vector<8x128xf32>
    %c0_1 = arith.constant 0 : index
    %c0_2 = arith.constant 0 : index
    %1 = vector.load %arg2[%c0_1, %c0_2] : memref<128x128xbf16, #tpu.memory_space<vmem>>, vector<128x128xbf16>
    %2 = arith.truncf %0 : vector<8x128xf32> to vector<8x128xbf16>
    %cst = arith.constant dense<0.000000e+00> : vector<8x128xf32>
    %3 = tpu.matmul %2, %1, %cst {dimension_numbers = #tpu.dot_dimension_numbers<[1], [0], [0], [1], [0, 0, 1, 1], [], []>} : vector<8x128xbf16>, vector<128x128xbf16>, vector<8x128xf32> -> vector<8x128xf32>
    %4 = arith.extf %2 : vector<8x128xbf16> to vector<8x128xf32>
    %5 = arith.subf %0, %4 : vector<8x128xf32>
    %6 = arith.truncf %5 : vector<8x128xf32> to vector<8x128xbf16>
    %cst_3 = arith.constant dense<0.000000e+00> : vector<8x128xf32>
    %7 = tpu.matmul %6, %1, %cst_3 {dimension_numbers = #tpu.dot_dimension_numbers<[1], [0], [0], [1], [0, 0, 1, 1], [], []>} : vector<8x128xbf16>, vector<128x128xbf16>, vector<8x128xf32> -> vector<8x128xf32>
    %8 = arith.addf %3, %7 : vector<8x128xf32>
    %cst_4 = arith.constant 3.125000e-02 : f32
    %9 = vector.broadcast %cst_4 : f32 to vector<8x128xf32>
    %10 = arith.mulf %8, %9 : vector<8x128xf32>
    %11 = arith.subf %0, %10 : vector<8x128xf32>
    %12 = arith.mulf %11, %11 : vector<8x128xf32>
    %13 = arith.truncf %12 : vector<8x128xf32> to vector<8x128xbf16>
    %cst_5 = arith.constant dense<0.000000e+00> : vector<8x128xf32>
    %14 = tpu.matmul %13, %1, %cst_5 {dimension_numbers = #tpu.dot_dimension_numbers<[1], [0], [0], [1], [0, 0, 1, 1], [], []>} : vector<8x128xbf16>, vector<128x128xbf16>, vector<8x128xf32> -> vector<8x128xf32>
    %15 = arith.extf %13 : vector<8x128xbf16> to vector<8x128xf32>
    %16 = arith.subf %12, %15 : vector<8x128xf32>
    %17 = arith.truncf %16 : vector<8x128xf32> to vector<8x128xbf16>
    %cst_6 = arith.constant dense<0.000000e+00> : vector<8x128xf32>
    %18 = tpu.matmul %17, %1, %cst_6 {dimension_numbers = #tpu.dot_dimension_numbers<[1], [0], [0], [1], [0, 0, 1, 1], [], []>} : vector<8x128xbf16>, vector<128x128xbf16>, vector<8x128xf32> -> vector<8x128xf32>
    %19 = arith.addf %14, %18 : vector<8x128xf32>
    %cst_7 = arith.constant 3.125000e-02 : f32
    %20 = vector.broadcast %cst_7 : f32 to vector<8x128xf32>
    %21 = arith.mulf %19, %20 : vector<8x128xf32>
    %cst_8 = arith.constant 9.99999974E-6 : f32
    %22 = vector.broadcast %cst_8 : f32 to vector<8x128xf32>
    %23 = arith.addf %21, %22 : vector<8x128xf32>
    %24 = math.rsqrt %23 : vector<8x128xf32>
    %25 = arith.mulf %11, %24 : vector<8x128xf32>
    %c0_9 = arith.constant 0 : index
    %c0_10 = arith.constant 0 : index
    %26 = vector.load %arg3[%c0_9, %c0_10] : memref<1x128xf32, #tpu.memory_space<vmem>>, vector<1x128xf32>
    %27 = vector.broadcast %26 : vector<1x128xf32> to vector<8x128xf32>
    %28 = arith.mulf %27, %25 : vector<8x128xf32>
    %c0_11 = arith.constant 0 : index
    %c0_12 = arith.constant 0 : index
    %29 = vector.load %arg4[%c0_11, %c0_12] : memref<1x128xf32, #tpu.memory_space<vmem>>, vector<1x128xf32>
    %30 = vector.broadcast %29 : vector<1x128xf32> to vector<8x128xf32>
    %31 = arith.addf %28, %30 : vector<8x128xf32>
    %c0_13 = arith.constant 0 : index
    %c0_14 = arith.constant 0 : index
    %32 = vector.load %arg5[%c0_13, %c0_14] : memref<8x128xf32, #tpu.memory_space<vmem>>, vector<8x128xf32>
    tpu.vector_store %arg5[%c0_13, %c0_14], %31 {strides = array<i32>} : memref<8x128xf32, #tpu.memory_space<vmem>>, vector<8x128xf32>,
    return
  }
  func.func @transform_0(%arg0: i32) -> (i32, i32) {
    %c0_i32 = arith.constant 0 : i32
    %c0_i32_0 = arith.constant 0 : i32
    return %arg0, %c0_i32 : i32, i32
  }
  func.func @transform_1(%arg0: i32) -> (i32, i32) {
    %c0_i32 = arith.constant 0 : i32
    %c0_i32_0 = arith.constant 0 : i32
    %c0_i32_1 = arith.constant 0 : i32
    return %c0_i32, %c0_i32_0 : i32, i32
  }
  func.func @transform_2(%arg0: i32) -> (i32, i32) {
    %c0_i32 = arith.constant 0 : i32
    %c0_i32_0 = arith.constant 0 : i32
    %c0_i32_1 = arith.constant 0 : i32
    return %c0_i32, %c0_i32_0 : i32, i32
  }
  func.func @transform_3(%arg0: i32) -> (i32, i32) {
    %c0_i32 = arith.constant 0 : i32
    %c0_i32_0 = arith.constant 0 : i32
    %c0_i32_1 = arith.constant 0 : i32
    return %c0_i32, %c0_i32_0 : i32, i32
  }
  func.func @transform_4(%arg0: i32) -> (i32, i32) {
    %c0_i32 = arith.constant 0 : i32
    %c0_i32_0 = arith.constant 0 : i32
    return %arg0, %c0_i32 : i32, i32
  }
}

</mosaic_0001>

<llo_original>
// kernel: tpu_custom_call.1
$region0: #{tpu_custom_call.1}
  #allocation0 [shape = 'u32[]', space=smem, size = 0x4, offset = 0x4, fixed_abs, tag = 'smem constant byte address 0x4 - core index']
  #allocation1 [shape = 'u32[72,128]{1,0:T(1,128)}', space=vmem, size = 0x9000, scoped, tag = 'internal scratch']
  %s0 = inlined_call_operand.hbm [shape: f32[4,128], index: 0, kind: input, shape index: {}]
  %s1 = inlined_call_operand.hbm [shape: bf16[128,128], index: 1, kind: input, shape index: {}]
  %s2 = inlined_call_operand.vmem [shape: f32[1,128], index: 2, kind: input, shape index: {}]
  %s3 = inlined_call_operand.vmem [shape: f32[1,128], index: 3, kind: input, shape index: {}]
  %s4 = inlined_call_operand.hbm [shape: f32[4,128], index: 4, kind: output, shape index: {}]
  %s5 = sld [smem:[#allocation0]]
  $region34: #{tpu_custom_call.1} parent=0
    _
  %s7 = ssub.s32 1, %s5
  %s8 = scalar_select 0, %s7, %s5
  $region1: #{tpu_custom_call.1} parent=0
    #allocation2 [shape = 'u8[4096]{0}', space=vmem, size = 0x1000, scoped, tag = 'input window, operand 0, single buffered']
    #allocation3 [shape = 's32[1]{0}', space=sflag, size = 0x4, scoped, tag = 'scoped memory for tpu_custom_call.1']
    #allocation4 [shape = 's32[1]{0}', space=sflag, size = 0x4, scoped, tag = 'scoped memory for tpu_custom_call.1']
    #allocation5 [shape = 'u8[32768]{0}', space=vmem, size = 0x8000, scoped, tag = 'input window, operand 1, single buffered']
    #allocation6 [shape = 's32[1]{0}', space=sflag, size = 0x4, scoped, tag = 'scoped memory for tpu_custom_call.1']
    #allocation7 [shape = 'u8[4096]{0}', space=vmem, size = 0x1000, scoped, tag = 'output window, operand 0, single buffered']
    %9 = vsyncpa [#allocation3], 0
    %10 = vsyncpa [#allocation6], 0
    %11 = vsyncpa [#allocation4], 0
    // Predicated region
    $region2: #{tpu_custom_call.1} parent=1 // pred_check
      _
    $region3: #{tpu_custom_call.1} parent=1 // pred_check_branch
      %13 = sbr.rel (0) target = $region5
    $region4: #{tpu_custom_call.1} parent=1 // pred_region
      %15 = vsyncadd [#allocation3], 64
      %s16 = sshll.u32 %s0, 4
      %s17 = int_to_ptr.hbm [resolvable:$true] %s16
      %s18 = sshll.u32 [#allocation2], 4
      %s19 = int_to_ptr.vmem [resolvable:$true] %s18
      %24 = dma.hbm_to_vmem [thread:$0]  %s17, 64, %s19, [#allocation3], 64, 64, 4
    $region5: #{tpu_custom_call.1} parent=1 // pred_fallthru
      _
    // Predicated region
    $region6: #{tpu_custom_call.1} parent=1 // pred_check
      _
    $region7: #{tpu_custom_call.1} parent=1 // pred_check_branch
      %26 = sbr.rel (0) target = $region9
    $region8: #{tpu_custom_call.1} parent=1 // pred_region
      %28 = vsyncadd [#allocation6], 0
      %s29 = sshll.u32 %s1, 4
      %s30 = int_to_ptr.hbm [resolvable:$true] %s29
      %s31 = sshll.u32 [#allocation5], 4
      %s32 = int_to_ptr.vmem [resolvable:$true] %s31
      %37 = dma.hbm_to_vmem [thread:$0]  %s30, 1024, %s32, [#allocation6], 64, 64, 4
    $region9: #{tpu_custom_call.1} parent=1 // pred_fallthru
      _
    // Predicated region
    $region10: #{tpu_custom_call.1} parent=1 // pred_check
      _
    $region11: #{tpu_custom_call.1} parent=1 // pred_check_branch
      %39 = sbr.rel (0) target = $region13
    $region12: #{tpu_custom_call.1} parent=1 // pred_region
      _
    $region13: #{tpu_custom_call.1} parent=1 // pred_fallthru
      _
    // Predicated region
    $region14: #{tpu_custom_call.1} parent=1 // pred_check
      _
    $region15: #{tpu_custom_call.1} parent=1 // pred_check_branch
      %41 = sbr.rel (0) target = $region17
    $region16: #{tpu_custom_call.1} parent=1 // pred_region
      _
    $region17: #{tpu_custom_call.1} parent=1 // pred_fallthru
      _
    // Predicated region
    $region18: #{tpu_custom_call.1} parent=1 // pred_check
      _
    $region19: #{tpu_custom_call.1} parent=1 // pred_check_branch
      %43 = sbr.rel (0) target = $region21
    $region20: #{tpu_custom_call.1} parent=1 // pred_region
      %45 = dma.done [#allocation3], 128
    $region21: #{tpu_custom_call.1} parent=1 // pred_fallthru
      _
    // Predicated region
    $region22: #{tpu_custom_call.1} parent=1 // pred_check
      _
    $region23: #{tpu_custom_call.1} parent=1 // pred_check_branch
      %47 = sbr.rel (0) target = $region25
    $region24: #{tpu_custom_call.1} parent=1 // pred_region
      %49 = dma.done [#allocation6], 1024
    $region25: #{tpu_custom_call.1} parent=1 // pred_fallthru
      _
    %v50 = vld [vmem:[#allocation2] sm:$0xff]
    %v51 = vld [vmem:[#allocation5] sm:$0xf]
    %v52 = vld [vmem:[#allocation5 + $0x4] sm:$0xf]
    %v53 = vld [vmem:[#allocation5 + $0x8] sm:$0xf]
    %v54 = vld [vmem:[#allocation5 + $0xc] sm:$0xf]
    %v55 = vld [vmem:[#allocation5 + $0x10] sm:$0xf]
    %v56 = vld [vmem:[#allocation5 + $0x14] sm:$0xf]
    %v57 = vld [vmem:[#allocation5 + $0x18] sm:$0xf]
    %v58 = vld [vmem:[#allocation5 + $0x1c] sm:$0xf]
    %v59 = vld [vmem:[#allocation5 + $0x20] sm:$0xf]
    %v60 = vld [vmem:[#allocation5 + $0x24] sm:$0xf]
    %v61 = vld [vmem:[#allocation5 + $0x28] sm:$0xf]
    %v62 = vld [vmem:[#allocation5 + $0x2c] sm:$0xf]
    %v63 = vld [vmem:[#allocation5 + $0x30] sm:$0xf]
    %v64 = vld [vmem:[#allocation5 + $0x34] sm:$0xf]
    %v65 = vld [vmem:[#allocation5 + $0x38] sm:$0xf]
    %v66 = vld [vmem:[#allocation5 + $0x3c] sm:$0xf]
    %v67 = vpack.c.bf16 %v50, %v50
    %v68 = vunpack.c.l.bf16 %v67
    %v69 = vsub.f32 %v50, %v68
    %v70 = vpack.c.bf16 %v69, %v69
    %v87 = vunpack.c.l.b16 %v51
    %v88 = vunpack.c.l.b16 %v52
    %v89 = vunpack.c.l.b16 %v53
    %v90 = vunpack.c.l.b16 %v54
    %v91 = vunpack.c.l.b16 %v55
    %v92 = vunpack.c.l.b16 %v56
    %v93 = vunpack.c.l.b16 %v57
    %v94 = vunpack.c.l.b16 %v58
    %v95 = vunpack.c.l.b16 %v59
    %v96 = vunpack.c.l.b16 %v60
    %v97 = vunpack.c.l.b16 %v61
    %v98 = vunpack.c.l.b16 %v62
    %v99 = vunpack.c.l.b16 %v63
    %v100 = vunpack.c.l.b16 %v64
    %v101 = vunpack.c.l.b16 %v65
    %v102 = vunpack.c.l.b16 %v66
    %v103 = vpack.c.b16 %v88, %v87
    %v104 = vpack.c.b16 %v90, %v89
    %v105 = vpack.c.b16 %v92, %v91
    %v106 = vpack.c.b16 %v94, %v93
    %v107 = vpack.c.b16 %v96, %v95
    %v108 = vpack.c.b16 %v98, %v97
    %v109 = vpack.c.b16 %v100, %v99
    %v110 = vpack.c.b16 %v102, %v101
    %119 = vmatpush.bf16.msra.mxu0 %v110
    %120 = vmatpush.bf16.msra.mxu0 %v109
    %121 = vmatpush.bf16.msra.mxu0 %v108
    %122 = vmatpush.bf16.msra.mxu0 %v107
    %123 = vmatpush.bf16.msra.mxu0 %v106
    %124 = vmatpush.bf16.msra.mxu0 %v105
    %125 = vmatpush.bf16.msra.mxu0 %v104
    %126 = vmatpush.bf16.msra.mxu0 %v103
    %127 = vmatmul.bf16.gmra.mxu0 %v70
    %v128 = vpop.f32.mrf.mxu0
    %v129 = vadd.f32 0.0, %v128
    %v130 = vpop.f32.mrf.mxu0
    %131 = vdwg.mxu0
    %132 = vmatpush.bf16.msra.mxu0 %v110
    %133 = vmatpush.bf16.msra.mxu0 %v109
    %134 = vmatpush.bf16.msra.mxu0 %v108
    %135 = vmatpush.bf16.msra.mxu0 %v107
    %136 = vmatpush.bf16.msra.mxu0 %v106
    %137 = vmatpush.bf16.msra.mxu0 %v105
    %138 = vmatpush.bf16.msra.mxu0 %v104
    %139 = vmatpush.bf16.msra.mxu0 %v103
    %140 = vmatmul.bf16.gmra.mxu0 %v67
    %v141 = vpop.f32.mrf.mxu0
    %v142 = vadd.f32 %v129, %v141
    %v143 = vpop.f32.mrf.mxu0
    %144 = vdwg.mxu0
    %v145 = vmul.f32 %v142, 0.03125
    %v146 = vsub.f32 %v50, %v145
    %v147 = vmul.f32 %v146, %v146
    %v148 = vpack.c.bf16 %v147, %v147
    %v149 = vunpack.c.l.bf16 %v148
    %v150 = vsub.f32 %v147, %v149
    %v151 = vpack.c.bf16 %v150, %v150
    %152 = vmatpush.bf16.msra.mxu0 %v110
    %153 = vmatpush.bf16.msra.mxu0 %v109
    %154 = vmatpush.bf16.msra.mxu0 %v108
    %155 = vmatpush.bf16.msra.mxu0 %v107
    %156 = vmatpush.bf16.msra.mxu0 %v106
    %157 = vmatpush.bf16.msra.mxu0 %v105
    %158 = vmatpush.bf16.msra.mxu0 %v104
    %159 = vmatpush.bf16.msra.mxu0 %v103
    %160 = vmatmul.bf16.gmra.mxu0 %v151
    %v161 = vpop.f32.mrf.mxu0
    %v162 = vadd.f32 0.0, %v161
    %v163 = vpop.f32.mrf.mxu0
    %164 = vdwg.mxu0
    %165 = vmatpush.bf16.msra.mxu0 %v110
    %166 = vmatpush.bf16.msra.mxu0 %v109
    %167 = vmatpush.bf16.msra.mxu0 %v108
    %168 = vmatpush.bf16.msra.mxu0 %v107
    %169 = vmatpush.bf16.msra.mxu0 %v106
    %170 = vmatpush.bf16.msra.mxu0 %v105
    %171 = vmatpush.bf16.msra.mxu0 %v104
    %172 = vmatpush.bf16.msra.mxu0 %v103
    %173 = vmatmul.bf16.gmra.mxu0 %v148
    %v174 = vpop.f32.mrf.mxu0
    %v175 = vadd.f32 %v162, %v174
    %v176 = vpop.f32.mrf.mxu0
    %177 = vdwg.mxu0
    %v178 = vmul.f32 %v175, 0.03125
    %v179 = vadd.f32 %v178, 1e-05
    %v180 = vrsqrt.pop %v179
    %v181 = vmul.f32 %v180, %v179
    %v182 = vmul.f32 %v181, %v180
    %v183 = vmul.f32 0.5, %v182
    %v184 = vsub.f32 1.5, %v183
    %v185 = vmul.f32 %v180, %v184
    %vm186 = vweird.f32 %v179
    %vm187 = vweird.f32 %v180
    %vm188 = vmor %vm186, %vm187
    %v189 = vsel %vm188, %v180, %v185
    %v190 = vmul.f32 %v146, %v189
    %v191 = vld [vmem:[%s2] sm:$0x1]
    %v193 = vperm.slane %v191, 0
    %v195 = vmul.f32 %v193, %v190
    %v196 = vld [vmem:[%s3] sm:$0x1]
    %v198 = vperm.slane %v196, 0
    %v200 = vadd.f32 %v195, %v198
    %201 = vst [vmem:[#allocation7] sm:$0xff] %v200
    // Predicated region
    $region26: #{tpu_custom_call.1} parent=1 // pred_check
      _
    $region27: #{tpu_custom_call.1} parent=1 // pred_check_branch
      %203 = sbr.rel (0) target = $region29
    $region28: #{tpu_custom_call.1} parent=1 // pred_region
      %205 = vsyncadd [#allocation4], 64
      %s206 = sshll.u32 [#allocation7], 4
      %s207 = int_to_ptr.vmem [resolvable:$true] %s206
      %s208 = sshll.u32 %s4, 4
      %s209 = int_to_ptr.hbm [resolvable:$true] %s208
      %214 = dma.vmem_to_hbm [thread:$0]  %s207, 64, %s209, [#allocation4], 64, 64, 4
    $region29: #{tpu_custom_call.1} parent=1 // pred_fallthru
      _
    // Predicated region
    $region30: #{tpu_custom_call.1} parent=1 // pred_check
      _
    $region31: #{tpu_custom_call.1} parent=1 // pred_check_branch
      %216 = sbr.rel (0) target = $region33
    $region32: #{tpu_custom_call.1} parent=1 // pred_region
      %218 = dma.done [#allocation4], 128
    $region33: #{tpu_custom_call.1} parent=1 // pred_fallthru
      _
    %219 = vsyncpa [#allocation3], 1
    %220 = vsyncpa [#allocation6], 1
    %221 = vsyncpa [#allocation4], 1

</llo_original>
